<compile_context>
chip_gen: v6e
topology: v6e:2x2x1
jax: 0.10.0
libtpu: 0.0.40
codegen_flags: <defaults>
</compile_context>

<pallas_src>
import jax
import jax.numpy as jnp
from jax.experimental import pallas as pl
from jax.experimental.pallas import tpu as pltpu


def _round_up(x, m):
    return pl.cdiv(x, m) * m


def adaptive_modulator_kernel(snr_ref, w1_ref, b1_ref, w2_ref, b2_ref,
                              w3_ref, b3_ref, out_ref):
    # Layer 1: Linear(1, M) + ReLU as a VPU broadcast FMA (no MXU for K=1).
    #   snr_ref: (TB, 1) f32, w1_ref/b1_ref: (1, M_pad) f32 -> (TB, M_pad)
    h = jnp.maximum(snr_ref[...] * w1_ref[...] + b1_ref[...], 0.0)
    # Layer 2: Linear(M, M) + ReLU. bf16 operands, f32 MXU accumulation.
    h = jnp.dot(h.astype(jnp.bfloat16), w2_ref[...],
                preferred_element_type=jnp.float32) + b2_ref[...]
    h = jnp.maximum(h, 0.0)
    # Layer 3: Linear(M, M) + Sigmoid.
    h = jnp.dot(h.astype(jnp.bfloat16), w3_ref[...],
                preferred_element_type=jnp.float32) + b3_ref[...]
    # Sigmoid via a single EUP tanh: sigmoid(x) = 0.5 * tanh(0.5 * x) + 0.5
    out_ref[...] = (0.5 * jnp.tanh(0.5 * h) + 0.5).astype(out_ref.dtype)


def prepare_params(params):
    """Pad features to 128 lanes and cast matmul weights to bf16 (done once)."""
    w1, b1, w2, b2, w3, b3 = (params["w1"], params["b1"], params["w2"],
                              params["b2"], params["w3"], params["b3"])
    M = w1.shape[1]
    M_pad = int(_round_up(max(M, 128), 128))
    dM = M_pad - M

    def pad_cols(x):  # (r, M) -> (r, M_pad), zero pad
        return jnp.pad(x, ((0, 0), (0, dM)))

    return dict(
        M=M, M_pad=M_pad,
        w1=pad_cols(w1).astype(jnp.float32),
        b1=pad_cols(b1).astype(jnp.float32),
        w2=jnp.pad(w2, ((0, dM), (0, dM))).astype(jnp.bfloat16),
        b2=pad_cols(b2).astype(jnp.float32),
        w3=jnp.pad(w3, ((0, dM), (0, dM))).astype(jnp.bfloat16),
        b3=pad_cols(b3).astype(jnp.float32),
    )


def adaptive_modulator(snr, prepared, *, block_b=4096, out_dtype=jnp.float32):
    """snr: (B, 1) float32. prepared: output of prepare_params(). Returns (B, M)."""
    B = snr.shape[0]
    M, M_pad = prepared["M"], prepared["M_pad"]

    # --- Batch tiling --------------------------------------------------------
    # Tile is a multiple of 8; B is padded to a whole number of tiles.
    B_min = int(_round_up(max(B, 8), 8))
    tb = int(_round_up(min(block_b, B_min), 8))
    # v7x: keep >= 2 grid steps whenever the batch is big enough so both
    # TensorCores get work under dimension_semantics=("parallel",).
    if B_min >= 16:
        tb = min(tb, int(_round_up(pl.cdiv(B_min, 2), 8)))
    B_pad = int(_round_up(B, tb))
    snr_p = jnp.pad(snr, ((0, B_pad - B), (0, 0)))
    grid = (B_pad // tb,)

    # Grid-invariant weights/biases: constant index_maps -> DMA'd once,
    # VMEM-resident across grid steps.
    const_row = pl.BlockSpec((1, M_pad), lambda i: (0, 0))       # w1 / biases
    const_mat = pl.BlockSpec((M_pad, M_pad), lambda i: (0, 0))   # w2 / w3 (bf16)

    out = pl.pallas_call(
        adaptive_modulator_kernel,
        out_shape=jax.ShapeDtypeStruct((B_pad, M_pad), out_dtype),
        grid=grid,
        in_specs=[
            pl.BlockSpec((tb, 1), lambda i: (i, 0)),   # snr tile
            const_row,                                 # w1 (1, M_pad) f32
            const_row,                                 # b1
            const_mat,                                 # w2 (bf16)
            const_row,                                 # b2
            const_mat,                                 # w3 (bf16)
            const_row,                                 # b3
        ],
        out_specs=pl.BlockSpec((tb, M_pad), lambda i: (i, 0)),
        compiler_params=pltpu.CompilerParams(
            dimension_semantics=("parallel",)),        # v7x: shard batch over 2 TCs
    )(snr_p, prepared["w1"], prepared["b1"], prepared["w2"], prepared["b2"],
      prepared["w3"], prepared["b3"])

    return out[:B, :M]


def init_params(key, M):
    """Deterministic synthetic init matching nn.Linear shapes (pre-transposed)."""
    ks = jax.random.split(key, 6)
    # PyTorch Linear(i, o): weight (o, i), bias (o,). We store W as (i, o).
    def lin(kw, kb, fan_in, fan_out):
        bound = 1.0 / jnp.sqrt(float(fan_in))
        w = jax.random.uniform(kw, (fan_in, fan_out), jnp.float32, -bound, bound)
        b = jax.random.uniform(kb, (1, fan_out), jnp.float32, -bound, bound)
        return w, b
    w1, b1 = lin(ks[0], ks[1], 1, M)
    w2, b2 = lin(ks[2], ks[3], M, M)
    w3, b3 = lin(ks[4], ks[5], M, M)
    return dict(w1=w1, b1=b1, w2=w2, b2=b2, w3=w3, b3=b3)


def reference_f32(snr, p):
    """Exact f32 reference (PyTorch semantics)."""
    h = jnp.maximum(snr @ p["w1"] + p["b1"], 0.0)
    h = jnp.maximum(h @ p["w2"] + p["b2"], 0.0)
    return jax.nn.sigmoid(h @ p["w3"] + p["b3"])


def reference_bf16(snr, p):
    """Reference that mirrors the kernel's bf16-matmul / f32-accumulate path."""
    h = jnp.maximum(snr @ p["w1"] + p["b1"], 0.0)
    h = jnp.dot(h.astype(jnp.bfloat16), p["w2"].astype(jnp.bfloat16),
                preferred_element_type=jnp.float32) + p["b2"]
    h = jnp.maximum(h, 0.0)
    h = jnp.dot(h.astype(jnp.bfloat16), p["w3"].astype(jnp.bfloat16),
                preferred_element_type=jnp.float32) + p["b3"]
    return 0.5 * jnp.tanh(0.5 * h) + 0.5


if __name__ == "__main__":
    key = jax.random.PRNGKey(0)
    k_snr, k_params, k_snr2 = jax.random.split(key, 3)

    # Small shapes consistent with the module: snr (B, 1), M hidden units.
    B, M = 8, 32
    snr = jax.random.uniform(k_snr, (B, 1), jnp.float32, 0.0, 20.0)  # SNR in dB
    params = init_params(k_params, M)
    prepared = prepare_params(params)   # pad + bf16-cast once, reused per call

    out = jax.block_until_ready(adaptive_modulator(snr, prepared))
    assert out.shape == (B, M)
    # Strong check: kernel matches a bf16-matmul-matched reference.
    assert jnp.allclose(out, reference_bf16(snr, params), atol=5e-4, rtol=0), \
        "mismatch vs bf16-matched reference (B=8)"
    # Looser check vs exact f32 math (tolerance reflects bf16 matmul quantization).
    assert jnp.allclose(out, reference_f32(snr, params), atol=3e-2, rtol=0), \
        "mismatch vs f32 reference (B=8)"

    # Exercise the pipelined batch grid + remainder padding and the >=2-step
    # split (B not a multiple of the tile).
    B2 = 600
    snr2 = jax.random.uniform(k_snr2, (B2, 1), jnp.float32, 0.0, 20.0)
    out2 = jax.block_until_ready(adaptive_modulator(snr2, prepared, block_b=4096))
    assert out2.shape == (B2, M)
    assert jnp.allclose(out2, reference_bf16(snr2, params), atol=5e-4, rtol=0), \
        "mismatch vs bf16-matched reference (B=600)"
    assert jnp.allclose(out2, reference_f32(snr2, params), atol=3e-2, rtol=0), \
        "mismatch vs f32 reference (B=600)"

    print("KERNEL_OK")
</pallas_src>

<mosaic_0001>
module attributes {stable_mosaic.version = 11 : i64} {
  func.func @adaptive_modulator_kernel(%arg0: i32, %arg1: memref<8x1xf32, #tpu.memory_space<vmem>>, %arg2: memref<1x128xf32, #tpu.memory_space<vmem>>, %arg3: memref<1x128xf32, #tpu.memory_space<vmem>>, %arg4: memref<128x128xbf16, #tpu.memory_space<vmem>>, %arg5: memref<1x128xf32, #tpu.memory_space<vmem>>, %arg6: memref<128x128xbf16, #tpu.memory_space<vmem>>, %arg7: memref<1x128xf32, #tpu.memory_space<vmem>>, %arg8: memref<8x128xf32, #tpu.memory_space<vmem>>) attributes {dimension_semantics = [#tpu.dimension_semantics<parallel>], iteration_bounds = array<i64: 1>, scalar_prefetch = 0 : i64, scratch_operands = 0 : i64, tpu.core_type = #tpu.core_type<tc>, window_params = [{transform_indices = @transform_0, window_bounds = array<i64: 8, 1>}, {pipeline_mode = #tpu.pipeline_mode<synchronous>, transform_indices = @transform_1, window_bounds = array<i64: 1, 128>}, {pipeline_mode = #tpu.pipeline_mode<synchronous>, transform_indices = @transform_2, window_bounds = array<i64: 1, 128>}, {pipeline_mode = #tpu.pipeline_mode<synchronous>, transform_indices = @transform_3, window_bounds = array<i64: 128, 128>}, {pipeline_mode = #tpu.pipeline_mode<synchronous>, transform_indices = @transform_4, window_bounds = array<i64: 1, 128>}, {pipeline_mode = #tpu.pipeline_mode<synchronous>, transform_indices = @transform_5, window_bounds = array<i64: 128, 128>}, {pipeline_mode = #tpu.pipeline_mode<synchronous>, transform_indices = @transform_6, window_bounds = array<i64: 1, 128>}, {transform_indices = @transform_7, window_bounds = array<i64: 8, 128>}]} {
    %c0 = arith.constant 0 : index
    %c0_0 = arith.constant 0 : index
    %0 = vector.load %arg1[%c0, %c0_0] : memref<8x1xf32, #tpu.memory_space<vmem>>, vector<8x1xf32>
    %c0_1 = arith.constant 0 : index
    %c0_2 = arith.constant 0 : index
    %1 = vector.load %arg2[%c0_1, %c0_2] : memref<1x128xf32, #tpu.memory_space<vmem>>, vector<1x128xf32>
    %2 = vector.broadcast %0 : vector<8x1xf32> to vector<8x128xf32>
    %3 = vector.broadcast %1 : vector<1x128xf32> to vector<8x128xf32>
    %4 = arith.mulf %2, %3 : vector<8x128xf32>
    %c0_3 = arith.constant 0 : index
    %c0_4 = arith.constant 0 : index
    %5 = vector.load %arg3[%c0_3, %c0_4] : memref<1x128xf32, #tpu.memory_space<vmem>>, vector<1x128xf32>
    %6 = vector.broadcast %5 : vector<1x128xf32> to vector<8x128xf32>
    %7 = arith.addf %4, %6 : vector<8x128xf32>
    %cst = arith.constant 0.000000e+00 : f32
    %8 = vector.broadcast %cst : f32 to vector<8x128xf32>
    %9 = arith.maximumf %7, %8 : vector<8x128xf32>
    %10 = arith.truncf %9 : vector<8x128xf32> to vector<8x128xbf16>
    %c0_5 = arith.constant 0 : index
    %c0_6 = arith.constant 0 : index
    %11 = vector.load %arg4[%c0_5, %c0_6] : memref<128x128xbf16, #tpu.memory_space<vmem>>, vector<128x128xbf16>
    %cst_7 = arith.constant dense<0.000000e+00> : vector<8x128xf32>
    %12 = tpu.matmul %10, %11, %cst_7 {dimension_numbers = #tpu.dot_dimension_numbers<[1], [0], [0], [1], [0, 0, 1, 1], [], []>} : vector<8x128xbf16>, vector<128x128xbf16>, vector<8x128xf32> -> vector<8x128xf32>
    %c0_8 = arith.constant 0 : index
    %c0_9 = arith.constant 0 : index
    %13 = vector.load %arg5[%c0_8, %c0_9] : memref<1x128xf32, #tpu.memory_space<vmem>>, vector<1x128xf32>
    %14 = vector.broadcast %13 : vector<1x128xf32> to vector<8x128xf32>
    %15 = arith.addf %12, %14 : vector<8x128xf32>
    %cst_10 = arith.constant 0.000000e+00 : f32
    %16 = vector.broadcast %cst_10 : f32 to vector<8x128xf32>
    %17 = arith.maximumf %15, %16 : vector<8x128xf32>
    %18 = arith.truncf %17 : vector<8x128xf32> to vector<8x128xbf16>
    %c0_11 = arith.constant 0 : index
    %c0_12 = arith.constant 0 : index
    %19 = vector.load %arg6[%c0_11, %c0_12] : memref<128x128xbf16, #tpu.memory_space<vmem>>, vector<128x128xbf16>
    %cst_13 = arith.constant dense<0.000000e+00> : vector<8x128xf32>
    %20 = tpu.matmul %18, %19, %cst_13 {dimension_numbers = #tpu.dot_dimension_numbers<[1], [0], [0], [1], [0, 0, 1, 1], [], []>} : vector<8x128xbf16>, vector<128x128xbf16>, vector<8x128xf32> -> vector<8x128xf32>
    %c0_14 = arith.constant 0 : index
    %c0_15 = arith.constant 0 : index
    %21 = vector.load %arg7[%c0_14, %c0_15] : memref<1x128xf32, #tpu.memory_space<vmem>>, vector<1x128xf32>
    %22 = vector.broadcast %21 : vector<1x128xf32> to vector<8x128xf32>
    %23 = arith.addf %20, %22 : vector<8x128xf32>
    %cst_16 = arith.constant 5.000000e-01 : f32
    %24 = vector.broadcast %cst_16 : f32 to vector<8x128xf32>
    %25 = arith.mulf %24, %23 : vector<8x128xf32>
    %26 = math.tanh %25 : vector<8x128xf32>
    %cst_17 = arith.constant 5.000000e-01 : f32
    %27 = vector.broadcast %cst_17 : f32 to vector<8x128xf32>
    %28 = arith.mulf %27, %26 : vector<8x128xf32>
    %cst_18 = arith.constant 5.000000e-01 : f32
    %29 = vector.broadcast %cst_18 : f32 to vector<8x128xf32>
    %30 = arith.addf %28, %29 : vector<8x128xf32>
    %c0_19 = arith.constant 0 : index
    %c0_20 = arith.constant 0 : index
    %31 = vector.load %arg8[%c0_19, %c0_20] : memref<8x128xf32, #tpu.memory_space<vmem>>, vector<8x128xf32>
    tpu.vector_store %arg8[%c0_19, %c0_20], %30 {strides = array<i32>} : memref<8x128xf32, #tpu.memory_space<vmem>>, vector<8x128xf32>,
    return
  }
  func.func @transform_0(%arg0: i32) -> (i32, i32) {
    %c0_i32 = arith.constant 0 : i32
    %c0_i32_0 = arith.constant 0 : i32
    return %arg0, %c0_i32 : i32, i32
  }
  func.func @transform_1(%arg0: i32) -> (i32, i32) {
    %c0_i32 = arith.constant 0 : i32
    %c0_i32_0 = arith.constant 0 : i32
    %c0_i32_1 = arith.constant 0 : i32
    return %c0_i32, %c0_i32_0 : i32, i32
  }
  func.func @transform_2(%arg0: i32) -> (i32, i32) {
    %c0_i32 = arith.constant 0 : i32
    %c0_i32_0 = arith.constant 0 : i32
    %c0_i32_1 = arith.constant 0 : i32
    return %c0_i32, %c0_i32_0 : i32, i32
  }
  func.func @transform_3(%arg0: i32) -> (i32, i32) {
    %c0_i32 = arith.constant 0 : i32
    %c0_i32_0 = arith.constant 0 : i32
    %c0_i32_1 = arith.constant 0 : i32
    return %c0_i32, %c0_i32_0 : i32, i32
  }
  func.func @transform_4(%arg0: i32) -> (i32, i32) {
    %c0_i32 = arith.constant 0 : i32
    %c0_i32_0 = arith.constant 0 : i32
    %c0_i32_1 = arith.constant 0 : i32
    return %c0_i32, %c0_i32_0 : i32, i32
  }
  func.func @transform_5(%arg0: i32) -> (i32, i32) {
    %c0_i32 = arith.constant 0 : i32
    %c0_i32_0 = arith.constant 0 : i32
    %c0_i32_1 = arith.constant 0 : i32
    return %c0_i32, %c0_i32_0 : i32, i32
  }
  func.func @transform_6(%arg0: i32) -> (i32, i32) {
    %c0_i32 = arith.constant 0 : i32
    %c0_i32_0 = arith.constant 0 : i32
    %c0_i32_1 = arith.constant 0 : i32
    return %c0_i32, %c0_i32_0 : i32, i32
  }
  func.func @transform_7(%arg0: i32) -> (i32, i32) {
    %c0_i32 = arith.constant 0 : i32
    %c0_i32_0 = arith.constant 0 : i32
    return %arg0, %c0_i32 : i32, i32
  }
}

</mosaic_0001>

<llo_original>
// kernel: tpu_custom_call.1
$region0: #{tpu_custom_call.1}
  #allocation0 [shape = 'u32[]', space=smem, size = 0x4, offset = 0x4, fixed_abs, tag = 'smem constant byte address 0x4 - core index']
  #allocation1 [shape = 'u32[144,128]{1,0:T(1,128)}', space=vmem, size = 0x12000, scoped, tag = 'internal scratch']
  %s0 = inlined_call_operand.vmem [shape: f32[8,1], index: 0, kind: input, shape index: {}]
  %s1 = inlined_call_operand.vmem [shape: f32[1,128], index: 1, kind: input, shape index: {}]
  %s2 = inlined_call_operand.vmem [shape: f32[1,128], index: 2, kind: input, shape index: {}]
  %s3 = inlined_call_operand.hbm [shape: bf16[128,128], index: 3, kind: input, shape index: {}]
  %s4 = inlined_call_operand.vmem [shape: f32[1,128], index: 4, kind: input, shape index: {}]
  %s5 = inlined_call_operand.hbm [shape: bf16[128,128], index: 5, kind: input, shape index: {}]
  %s6 = inlined_call_operand.vmem [shape: f32[1,128], index: 6, kind: input, shape index: {}]
  %s7 = inlined_call_operand.hbm [shape: f32[8,128], index: 7, kind: output, shape index: {}]
  %s8 = sld [smem:[#allocation0]]
  $region46: #{tpu_custom_call.1} parent=0
    _
  %s10 = ssub.s32 1, %s8
  %s11 = scalar_select 0, %s10, %s8
  $region1: #{tpu_custom_call.1} parent=0
    #allocation2 [shape = 'u8[32768]{0}', space=vmem, size = 0x8000, scoped, tag = 'input window, operand 3, single buffered']
    #allocation3 [shape = 's32[1]{0}', space=sflag, size = 0x4, scoped, tag = 'scoped memory for tpu_custom_call.1']
    #allocation4 [shape = 's32[1]{0}', space=sflag, size = 0x4, scoped, tag = 'scoped memory for tpu_custom_call.1']
    #allocation5 [shape = 'u8[32768]{0}', space=vmem, size = 0x8000, scoped, tag = 'input window, operand 5, single buffered']
    #allocation6 [shape = 's32[1]{0}', space=sflag, size = 0x4, scoped, tag = 'scoped memory for tpu_custom_call.1']
    #allocation7 [shape = 'u8[4096]{0}', space=vmem, size = 0x1000, scoped, tag = 'output window, operand 0, single buffered']
    %12 = vsyncpa [#allocation3], 0
    %13 = vsyncpa [#allocation6], 0
    %14 = vsyncpa [#allocation4], 0
    // Predicated region
    $region2: #{tpu_custom_call.1} parent=1 // pred_check
      _
    $region3: #{tpu_custom_call.1} parent=1 // pred_check_branch
      %16 = sbr.rel (0) target = $region5
    $region4: #{tpu_custom_call.1} parent=1 // pred_region
      _
    $region5: #{tpu_custom_call.1} parent=1 // pred_fallthru
      _
    // Predicated region
    $region6: #{tpu_custom_call.1} parent=1 // pred_check
      _
    $region7: #{tpu_custom_call.1} parent=1 // pred_check_branch
      %18 = sbr.rel (0) target = $region9
    $region8: #{tpu_custom_call.1} parent=1 // pred_region
      _
    $region9: #{tpu_custom_call.1} parent=1 // pred_fallthru
      _
    // Predicated region
    $region10: #{tpu_custom_call.1} parent=1 // pred_check
      _
    $region11: #{tpu_custom_call.1} parent=1 // pred_check_branch
      %20 = sbr.rel (0) target = $region13
    $region12: #{tpu_custom_call.1} parent=1 // pred_region
      _
    $region13: #{tpu_custom_call.1} parent=1 // pred_fallthru
      _
    // Predicated region
    $region14: #{tpu_custom_call.1} parent=1 // pred_check
      _
    $region15: #{tpu_custom_call.1} parent=1 // pred_check_branch
      %22 = sbr.rel (0) target = $region17
    $region16: #{tpu_custom_call.1} parent=1 // pred_region
      %s24 = ssub.s32 1024, 1024
      %25 = vsyncadd [#allocation3], %s24
      %s26 = sshll.u32 [#allocation2], 4
      %s27 = int_to_ptr.vmem [resolvable:$true] %s26
      %32 = dma.hbm_to_vmem [thread:$0]  %s3, 1024, %s27, [#allocation3], 64, 64, 4
    $region17: #{tpu_custom_call.1} parent=1 // pred_fallthru
      _
    // Predicated region
    $region18: #{tpu_custom_call.1} parent=1 // pred_check
      _
    $region19: #{tpu_custom_call.1} parent=1 // pred_check_branch
      %34 = sbr.rel (0) target = $region21
    $region20: #{tpu_custom_call.1} parent=1 // pred_region
      _
    $region21: #{tpu_custom_call.1} parent=1 // pred_fallthru
      _
    // Predicated region
    $region22: #{tpu_custom_call.1} parent=1 // pred_check
      _
    $region23: #{tpu_custom_call.1} parent=1 // pred_check_branch
      %36 = sbr.rel (0) target = $region25
    $region24: #{tpu_custom_call.1} parent=1 // pred_region
      %s38 = ssub.s32 1024, 1024
      %39 = vsyncadd [#allocation6], %s38
      %s40 = sshll.u32 [#allocation5], 4
      %s41 = int_to_ptr.vmem [resolvable:$true] %s40
      %46 = dma.hbm_to_vmem [thread:$0]  %s5, 1024, %s41, [#allocation6], 64, 64, 4
    $region25: #{tpu_custom_call.1} parent=1 // pred_fallthru
      _
    // Predicated region
    $region26: #{tpu_custom_call.1} parent=1 // pred_check
      _
    $region27: #{tpu_custom_call.1} parent=1 // pred_check_branch
      %48 = sbr.rel (0) target = $region29
    $region28: #{tpu_custom_call.1} parent=1 // pred_region
      _
    $region29: #{tpu_custom_call.1} parent=1 // pred_fallthru
      _
    // Predicated region
    $region30: #{tpu_custom_call.1} parent=1 // pred_check
      _
    $region31: #{tpu_custom_call.1} parent=1 // pred_check_branch
      %50 = sbr.rel (0) target = $region33
    $region32: #{tpu_custom_call.1} parent=1 // pred_region
      %51 = dma.done [#allocation3], 1024
    $region33: #{tpu_custom_call.1} parent=1 // pred_fallthru
      _
    // Predicated region
    $region34: #{tpu_custom_call.1} parent=1 // pred_check
      _
    $region35: #{tpu_custom_call.1} parent=1 // pred_check_branch
      %53 = sbr.rel (0) target = $region37
    $region36: #{tpu_custom_call.1} parent=1 // pred_region
      %54 = dma.done [#allocation6], 1024
    $region37: #{tpu_custom_call.1} parent=1 // pred_fallthru
      _
    %v56 = vld [vmem:[%s0] sm:$0xff]
    %v57 = vld [vmem:[%s1] sm:$0x1]
    %59 = vset.pattern.permute.xlu0 0
    %60 = vperm.xlu0 %59, %v56
    %v61 = vpop.permute.xlu0 %60
    %v64 = vlaneseq
    %v65 = vshrl.u32 %v64, 7
    %v66 = vsub.s32 0, %v65
    %v67 = vrot.slane %v57, %v66
    %v69 = vmul.f32 %v61, %v67
    %v70 = vld [vmem:[%s2] sm:$0x1]
    %v72 = vlaneseq
    %v73 = vshrl.u32 %v72, 7
    %v74 = vsub.s32 0, %v73
    %v75 = vrot.slane %v70, %v74
    %v77 = vadd.f32 %v69, %v75
    %v78 = vmax.f32 %v77, 0.0
    %v79 = vpack.c.bf16 %v78, %v78
    %v80 = vld [vmem:[#allocation2] sm:$0xf]
    %v81 = vld [vmem:[#allocation2 + $0x4] sm:$0xf]
    %v82 = vld [vmem:[#allocation2 + $0x8] sm:$0xf]
    %v83 = vld [vmem:[#allocation2 + $0xc] sm:$0xf]
    %v84 = vld [vmem:[#allocation2 + $0x10] sm:$0xf]
    %v85 = vld [vmem:[#allocation2 + $0x14] sm:$0xf]
    %v86 = vld [vmem:[#allocation2 + $0x18] sm:$0xf]
    %v87 = vld [vmem:[#allocation2 + $0x1c] sm:$0xf]
    %v88 = vld [vmem:[#allocation2 + $0x20] sm:$0xf]
    %v89 = vld [vmem:[#allocation2 + $0x24] sm:$0xf]
    %v90 = vld [vmem:[#allocation2 + $0x28] sm:$0xf]
    %v91 = vld [vmem:[#allocation2 + $0x2c] sm:$0xf]
    %v92 = vld [vmem:[#allocation2 + $0x30] sm:$0xf]
    %v93 = vld [vmem:[#allocation2 + $0x34] sm:$0xf]
    %v94 = vld [vmem:[#allocation2 + $0x38] sm:$0xf]
    %v95 = vld [vmem:[#allocation2 + $0x3c] sm:$0xf]
    %v96 = vld [vmem:[%s4] sm:$0x1]
    %v98 = vlaneseq
    %v99 = vshrl.u32 %v98, 7
    %v100 = vsub.s32 0, %v99
    %v101 = vrot.slane %v96, %v100
    %v119 = vunpack.c.l.b16 %v80
    %v120 = vunpack.c.l.b16 %v81
    %v121 = vunpack.c.l.b16 %v82
    %v122 = vunpack.c.l.b16 %v83
    %v123 = vunpack.c.l.b16 %v84
    %v124 = vunpack.c.l.b16 %v85
    %v125 = vunpack.c.l.b16 %v86
    %v126 = vunpack.c.l.b16 %v87
    %v127 = vunpack.c.l.b16 %v88
    %v128 = vunpack.c.l.b16 %v89
    %v129 = vunpack.c.l.b16 %v90
    %v130 = vunpack.c.l.b16 %v91
    %v131 = vunpack.c.l.b16 %v92
    %v132 = vunpack.c.l.b16 %v93
    %v133 = vunpack.c.l.b16 %v94
    %v134 = vunpack.c.l.b16 %v95
    %v135 = vpack.c.b16 %v120, %v119
    %v136 = vpack.c.b16 %v122, %v121
    %v137 = vpack.c.b16 %v124, %v123
    %v138 = vpack.c.b16 %v126, %v125
    %v139 = vpack.c.b16 %v128, %v127
    %v140 = vpack.c.b16 %v130, %v129
    %v141 = vpack.c.b16 %v132, %v131
    %v142 = vpack.c.b16 %v134, %v133
    %151 = vmatprep.subr.bf16.mxu0 0
    %152 = vmatpush1.bf16.msra.mxu0 %v142
    %153 = vmatprep.subr.bf16.mxu0 0
    %154 = vmatpush1.bf16.msra.mxu0 %v141
    %155 = vmatprep.subr.bf16.mxu0 0
    %156 = vmatpush1.bf16.msra.mxu0 %v140
    %157 = vmatprep.subr.bf16.mxu0 0
    %158 = vmatpush1.bf16.msra.mxu0 %v139
    %159 = vmatprep.subr.bf16.mxu0 0
    %160 = vmatpush1.bf16.msra.mxu0 %v138
    %161 = vmatprep.subr.bf16.mxu0 0
    %162 = vmatpush1.bf16.msra.mxu0 %v137
    %163 = vmatprep.subr.bf16.mxu0 0
    %164 = vmatpush1.bf16.msra.mxu0 %v136
    %165 = vmatprep.subr.bf16.mxu0 0
    %166 = vmatpush1.bf16.msra.mxu0 %v135
    %167 = vmatprep.subr.bf16.mxu0 0
    %168 = vmatpush2.bf16.msra.mxu0 0
    %169 = vmatprep.subr.bf16.mxu0 0
    %170 = vmatpush2.bf16.msra.mxu0 0
    %171 = vmatprep.subr.bf16.mxu0 0
    %172 = vmatpush2.bf16.msra.mxu0 0
    %173 = vmatprep.subr.bf16.mxu0 0
    %174 = vmatpush2.bf16.msra.mxu0 0
    %175 = vmatprep.subr.bf16.mxu0 0
    %176 = vmatpush2.bf16.msra.mxu0 0
    %177 = vmatprep.subr.bf16.mxu0 0
    %178 = vmatpush2.bf16.msra.mxu0 0
    %179 = vmatprep.subr.bf16.mxu0 0
    %180 = vmatpush2.bf16.msra.mxu0 0
    %181 = vmatprep.subr.bf16.mxu0 0
    %182 = vmatpush2.bf16.msra.mxu0 0
    %183 = vmatprep.mubr.bf16.mxu0 0
    %184 = vmatmul.mubr.bf16.gmra.mxu0 %v79
    %v185 = vpop.f32.mrf.mxu0
    %v186 = vadd.f32 %v101, %v185
    %v187 = vpop.f32.mrf.mxu0
    %v188 = vpop.f32.mrf.mxu0
    %v189 = vpop.f32.mrf.mxu0
    %190 = vdwg.mxu0
    %v191 = vmax.f32 %v186, 0.0
    %v192 = vpack.c.bf16 %v191, %v191
    %v193 = vld [vmem:[#allocation5] sm:$0xf]
    %v194 = vld [vmem:[#allocation5 + $0x4] sm:$0xf]
    %v195 = vld [vmem:[#allocation5 + $0x8] sm:$0xf]
    %v196 = vld [vmem:[#allocation5 + $0xc] sm:$0xf]
    %v197 = vld [vmem:[#allocation5 + $0x10] sm:$0xf]
    %v198 = vld [vmem:[#allocation5 + $0x14] sm:$0xf]
    %v199 = vld [vmem:[#allocation5 + $0x18] sm:$0xf]
    %v200 = vld [vmem:[#allocation5 + $0x1c] sm:$0xf]
    %v201 = vld [vmem:[#allocation5 + $0x20] sm:$0xf]
    %v202 = vld [vmem:[#allocation5 + $0x24] sm:$0xf]
    %v203 = vld [vmem:[#allocation5 + $0x28] sm:$0xf]
    %v204 = vld [vmem:[#allocation5 + $0x2c] sm:$0xf]
    %v205 = vld [vmem:[#allocation5 + $0x30] sm:$0xf]
    %v206 = vld [vmem:[#allocation5 + $0x34] sm:$0xf]
    %v207 = vld [vmem:[#allocation5 + $0x38] sm:$0xf]
    %v208 = vld [vmem:[#allocation5 + $0x3c] sm:$0xf]
    %v209 = vld [vmem:[%s6] sm:$0x1]
    %v211 = vlaneseq
    %v212 = vshrl.u32 %v211, 7
    %v213 = vsub.s32 0, %v212
    %v214 = vrot.slane %v209, %v213
    %v232 = vunpack.c.l.b16 %v193
    %v233 = vunpack.c.l.b16 %v194
    %v234 = vunpack.c.l.b16 %v195
    %v235 = vunpack.c.l.b16 %v196
    %v236 = vunpack.c.l.b16 %v197
    %v237 = vunpack.c.l.b16 %v198
    %v238 = vunpack.c.l.b16 %v199
    %v239 = vunpack.c.l.b16 %v200
    %v240 = vunpack.c.l.b16 %v201
    %v241 = vunpack.c.l.b16 %v202
    %v242 = vunpack.c.l.b16 %v203
    %v243 = vunpack.c.l.b16 %v204
    %v244 = vunpack.c.l.b16 %v205
    %v245 = vunpack.c.l.b16 %v206
    %v246 = vunpack.c.l.b16 %v207
    %v247 = vunpack.c.l.b16 %v208
    %v248 = vpack.c.b16 %v233, %v232
    %v249 = vpack.c.b16 %v235, %v234
    %v250 = vpack.c.b16 %v237, %v236
    %v251 = vpack.c.b16 %v239, %v238
    %v252 = vpack.c.b16 %v241, %v240
    %v253 = vpack.c.b16 %v243, %v242
    %v254 = vpack.c.b16 %v245, %v244
    %v255 = vpack.c.b16 %v247, %v246
    %264 = vmatprep.subr.bf16.mxu0 0
    %265 = vmatpush1.bf16.msra.mxu0 %v255
    %266 = vmatprep.subr.bf16.mxu0 0
    %267 = vmatpush1.bf16.msra.mxu0 %v254
    %268 = vmatprep.subr.bf16.mxu0 0
    %269 = vmatpush1.bf16.msra.mxu0 %v253
    %270 = vmatprep.subr.bf16.mxu0 0
    %271 = vmatpush1.bf16.msra.mxu0 %v252
    %272 = vmatprep.subr.bf16.mxu0 0
    %273 = vmatpush1.bf16.msra.mxu0 %v251
    %274 = vmatprep.subr.bf16.mxu0 0
    %275 = vmatpush1.bf16.msra.mxu0 %v250
    %276 = vmatprep.subr.bf16.mxu0 0
    %277 = vmatpush1.bf16.msra.mxu0 %v249
    %278 = vmatprep.subr.bf16.mxu0 0
    %279 = vmatpush1.bf16.msra.mxu0 %v248
    %280 = vmatprep.subr.bf16.mxu0 0
    %281 = vmatpush2.bf16.msra.mxu0 0
    %282 = vmatprep.subr.bf16.mxu0 0
    %283 = vmatpush2.bf16.msra.mxu0 0
    %284 = vmatprep.subr.bf16.mxu0 0
    %285 = vmatpush2.bf16.msra.mxu0 0
    %286 = vmatprep.subr.bf16.mxu0 0
    %287 = vmatpush2.bf16.msra.mxu0 0
    %288 = vmatprep.subr.bf16.mxu0 0
    %289 = vmatpush2.bf16.msra.mxu0 0
    %290 = vmatprep.subr.bf16.mxu0 0
    %291 = vmatpush2.bf16.msra.mxu0 0
    %292 = vmatprep.subr.bf16.mxu0 0
    %293 = vmatpush2.bf16.msra.mxu0 0
    %294 = vmatprep.subr.bf16.mxu0 0
    %295 = vmatpush2.bf16.msra.mxu0 0
    %296 = vmatprep.mubr.bf16.mxu0 0
    %297 = vmatmul.mubr.bf16.gmra.mxu0 %v192
    %v298 = vpop.f32.mrf.mxu0
    %v299 = vadd.f32 %v214, %v298
    %v300 = vpop.f32.mrf.mxu0
    %v301 = vpop.f32.mrf.mxu0
    %v302 = vpop.f32.mrf.mxu0
    %303 = vdwg.mxu0
    %v304 = vmul.f32 %v299, 0.5
    %v305 = vtanh.pop %v304
    %v306 = vmul.f32 %v305, 0.5
    %v307 = vadd.f32 %v306, 0.5
    %308 = vst [vmem:[#allocation7] sm:$0xff] %v307
    // Predicated region
    $region38: #{tpu_custom_call.1} parent=1 // pred_check
      _
    $region39: #{tpu_custom_call.1} parent=1 // pred_check_branch
      %310 = sbr.rel (0) target = $region41
    $region40: #{tpu_custom_call.1} parent=1 // pred_region
      %s312 = ssub.s32 128, 128
      %313 = vsyncadd [#allocation4], %s312
      %s315 = sshll.u32 [#allocation7], 4
      %s316 = int_to_ptr.vmem [resolvable:$true] %s315
      %318 = dma.vmem_to_hbm [thread:$0]  %s316, 128, %s7, [#allocation4]
    $region41: #{tpu_custom_call.1} parent=1 // pred_fallthru
      _
    // Predicated region
    $region42: #{tpu_custom_call.1} parent=1 // pred_check
      _
    $region43: #{tpu_custom_call.1} parent=1 // pred_check_branch
      %320 = sbr.rel (0) target = $region45
    $region44: #{tpu_custom_call.1} parent=1 // pred_region
      %321 = dma.done [#allocation4], 128
    $region45: #{tpu_custom_call.1} parent=1 // pred_fallthru
      _
    %322 = vsyncpa [#allocation3], 1
    %323 = vsyncpa [#allocation6], 1
    %324 = vsyncpa [#allocation4], 1

</llo_original>
